<compile_context>
chip_gen: v6e
topology: v6e:2x2x1
jax: 0.10.0
libtpu: 0.0.40
codegen_flags: <defaults>
</compile_context>

<pallas_src>
import jax
import jax.numpy as jnp
import numpy as np
from jax.experimental import pallas as pl
from jax.experimental.pallas import tpu as pltpu

EPS = 1e-5


def _vmem_budgets():
    """Return (tile_budget_bytes, vmem_limit_bytes), generation-aware."""
    try:
        cap = int(pltpu.get_tpu_info().vmem_capacity_bytes)
    except Exception:
        cap = 0
    if cap >= 96 * 1024 * 1024:
        # v5e / v6e: 128 MiB physical VMEM -> bigger output blocks, fewer
        # grid steps, longer unbroken store DMAs.
        return 48 * 1024 * 1024, 96 * 1024 * 1024
    # v7x (64 MiB physical) or unknown: stay conservative.
    return 20 * 1024 * 1024, 48 * 1024 * 1024


def _pick_tiles(B, F, E, out_itemsize, budget_bytes):
    """Pick (batch_block, e_block).

    Preference: widest lane-dense E block that fits (lane-dense stores are the
    biggest single lever), shrinking the batch block only when needed.  Blocks
    keep TPU tiling constraints: e block is a multiple of 128 (or the full E);
    batch block is a multiple of 8 (or the full B) so both the (tb, F) input
    block and the (tb*F, te) output block are sublane-aligned.
    """
    if E % 128 == 0:
        te_cands = [t for t in range(E, 0, -128) if E % t == 0]
    else:
        te_cands = [E]  # full-dim block (exception to the 128 rule)

    tb_cands = [t for t in range(B, 0, -1)
                if B % t == 0 and (t == B or t % 8 == 0)]
    if not tb_cands:
        tb_cands = [B]

    def footprint(tb, te):
        out_blk = 2 * tb * F * te * out_itemsize          # double-buffered output block
        x_blk = 2 * tb * F * 4                            # double-buffered x tile
        params = 2 * (2 * F + 2 * te) * 4                 # scale/shift + w/bias tiles
        scratch = ((tb * F + 7) // 8) * 8 * 128 * 4       # lane-padded xn column scratch
        return out_blk + x_blk + params + scratch

    tb, te = None, None
    for cand_te in te_cands:
        for cand_tb in tb_cands:
            if footprint(cand_tb, cand_te) <= budget_bytes:
                tb, te = cand_tb, cand_te
                break
        if tb is not None:
            break
    if tb is None:
        tb, te = tb_cands[-1], te_cands[-1]

    # v7x has 2 TensorCores: give the "parallel" batch axis >= 2 steps when the
    # output is non-trivial and everything would otherwise fit in one block.
    out_bytes = B * F * E * out_itemsize
    if (B // tb) * (E // te) == 1 and out_bytes > 2 * 1024 * 1024:
        for cand_tb in tb_cands:
            if cand_tb < B and footprint(cand_tb, te) <= budget_bytes:
                tb = cand_tb
                break
    return tb, te


def bn_fold_kernel(x_ref, gamma_ref, beta_ref, scale_ref, shift_ref):
    """Fold training-mode BatchNorm1d into per-feature (scale, shift)."""
    x = x_ref[...].astype(jnp.float32)                         # (B, F)
    mean = jnp.mean(x, axis=0, keepdims=True)                  # (1, F)
    var = jnp.mean((x - mean) ** 2, axis=0, keepdims=True)     # (1, F), biased (PyTorch)
    scale = gamma_ref[...].astype(jnp.float32) * jax.lax.rsqrt(var + EPS)
    shift = beta_ref[...].astype(jnp.float32) - mean * scale
    scale_ref[...] = scale
    shift_ref[...] = shift


def _bn_fold(x, gamma, beta):
    B, F = x.shape
    return pl.pallas_call(
        bn_fold_kernel,
        out_shape=(jax.ShapeDtypeStruct((1, F), jnp.float32),
                   jax.ShapeDtypeStruct((1, F), jnp.float32)),
        cost_estimate=pl.CostEstimate(
            flops=int(6 * B * F),
            transcendentals=int(F),
            bytes_accessed=int((B * F + 4 * F) * 4),
        ),
    )(x, gamma, beta)


def feature_emb_kernel(x_ref, scale_ref, shift_ref, w_ref, b_ref, o_ref, xn_col_ref):
    # x_ref:        (tb, F)    batch tile of raw features
    # scale/shift:  (1, F)     folded BatchNorm (constant block index, DMA'd once)
    # w_ref/b_ref:  (1, te)    tile of the projector weight / bias
    # o_ref:        (tb*F, te) lane-dense 2-D output block
    # xn_col_ref:   (tb*F, 1)  VMEM scratch: normalized features as a column.
    #
    # The (tb, F) -> (tb*F, 1) reshape is a lane->sublane relayout; it is
    # computed only when ei == 0 and reused across all E tiles of this batch
    # block (the E axis is "arbitrary", the batch axis stays "parallel").
    @pl.when(pl.program_id(1) == 0)
    def _():
        xn = x_ref[...].astype(jnp.float32) * scale_ref[...] + shift_ref[...]  # (tb, F)
        rows = xn.shape[0] * xn.shape[1]
        xn_col_ref[...] = xn[:, :, None].reshape(rows, 1)

    # Dropout(p=0.0) is the identity -> nothing to do.
    # Rank-1 projection: (rows, 1) x (1, te) broadcast on the VPU (exact f32),
    # hidden under the dominant HBM output store.
    out = (xn_col_ref[...] * w_ref[...].astype(jnp.float32)
           + b_ref[...].astype(jnp.float32))
    o_ref[...] = out.astype(o_ref.dtype)


def feature_embeddings(x, gamma, beta, w, b, *, out_dtype=None):
    """FeatureEmbeddings forward.

    x: (B, F); gamma/beta: (1, F) [BatchNorm1d weight/bias]; w/b: (1, E)
    [Linear(1, E) weight.T / bias].  Returns (B, F, E).

    For production, pass out_dtype=jnp.bfloat16: the kernel is HBM-writeback
    bound and bf16 halves the dominant store (accumulation stays f32).
    """
    B, F = x.shape
    E = w.shape[1]
    out_dtype = jnp.dtype(out_dtype) if out_dtype is not None else x.dtype

    tile_budget, vmem_limit = _vmem_budgets()
    tb, te = _pick_tiles(B, F, E, out_dtype.itemsize, tile_budget)
    nb, ne = B // tb, E // te

    # Pre-pass: fold training-mode BatchNorm into per-feature scale/shift
    # (computed once, not once per grid step).
    scale, shift = _bn_fold(x, gamma, beta)

    bytes_in = (B * F + 2 * F + 2 * E) * 4
    bytes_out = B * F * E * out_dtype.itemsize

    out2d = pl.pallas_call(
        feature_emb_kernel,
        out_shape=jax.ShapeDtypeStruct((B * F, E), out_dtype),
        grid_spec=pltpu.PrefetchScalarGridSpec(
            num_scalar_prefetch=0,
            grid=(nb, ne),
            in_specs=[
                pl.BlockSpec((tb, F), lambda bi, ei: (bi, 0)),    # x batch tile
                pl.BlockSpec((1, F), lambda bi, ei: (0, 0)),      # folded scale
                pl.BlockSpec((1, F), lambda bi, ei: (0, 0)),      # folded shift
                pl.BlockSpec((1, te), lambda bi, ei: (0, ei)),    # projector weight tile
                pl.BlockSpec((1, te), lambda bi, ei: (0, ei)),    # projector bias tile
            ],
            out_specs=pl.BlockSpec((tb * F, te), lambda bi, ei: (bi, ei)),
            scratch_shapes=[pltpu.VMEM((tb * F, 1), jnp.float32)],
        ),
        compiler_params=pltpu.CompilerParams(
            dimension_semantics=("parallel", "arbitrary"),
            vmem_limit_bytes=vmem_limit,
        ),
        cost_estimate=pl.CostEstimate(
            flops=int(2 * B * F * E + 2 * B * F),
            transcendentals=0,
            bytes_accessed=int(bytes_in + bytes_out),
        ),
    )(x, scale, shift, w, b)

    # (B*F, E) -> (B, F, E) is a pure metadata reshape in XLA (free).
    return out2d.reshape(B, F, E)


def reference(x, gamma, beta, w, b):
    mean = jnp.mean(x, axis=0, keepdims=True)
    var = jnp.mean((x - mean) ** 2, axis=0, keepdims=True)
    xn = (x - mean) / jnp.sqrt(var + EPS) * gamma + beta
    return xn[:, :, None] * w[0][None, None, :] + b[0][None, None, :]


if __name__ == "__main__":
    B, F, E = 8, 16, 256  # batch, features_dim, embedding_dim
    key = jax.random.PRNGKey(0)
    kx, kg, kb, kw, kbb = jax.random.split(key, 5)

    x = jax.random.normal(kx, (B, F), dtype=jnp.float32)

    # Deterministic parameter init (shapes follow the PyTorch module):
    #   BatchNorm1d(F): weight (F,), bias (F,)        -> stored as (1, F)
    #   Linear(1, E):   weight (E, 1), bias (E,)      -> stored as (1, E)
    gamma = 1.0 + 0.1 * jax.random.normal(kg, (1, F), dtype=jnp.float32)
    beta = 0.1 * jax.random.normal(kb, (1, F), dtype=jnp.float32)
    w = jax.random.uniform(kw, (1, E), dtype=jnp.float32, minval=-1.0, maxval=1.0)
    b = jax.random.uniform(kbb, (1, E), dtype=jnp.float32, minval=-1.0, maxval=1.0)

    out = feature_embeddings(x, gamma, beta, w, b)
    out = jax.block_until_ready(out)

    ref = reference(x, gamma, beta, w, b)
    np.testing.assert_allclose(np.asarray(out), np.asarray(ref), rtol=1e-5, atol=1e-5)

    print("KERNEL_OK")
</pallas_src>

<mosaic_0001>
module attributes {stable_mosaic.version = 11 : i64} {
  func.func @bn_fold_kernel(%arg0: memref<8x16xf32, #tpu.memory_space<vmem>>, %arg1: memref<1x16xf32, #tpu.memory_space<vmem>>, %arg2: memref<1x16xf32, #tpu.memory_space<vmem>>, %arg3: memref<1x16xf32, #tpu.memory_space<vmem>>, %arg4: memref<1x16xf32, #tpu.memory_space<vmem>>) attributes {dimension_semantics = [], scalar_prefetch = 0 : i64, scratch_operands = 0 : i64, tpu.core_type = #tpu.core_type<tc>} {
    %c0 = arith.constant 0 : index
    %c0_0 = arith.constant 0 : index
    %0 = vector.load %arg0[%c0, %c0_0] : memref<8x16xf32, #tpu.memory_space<vmem>>, vector<8x16xf32>
    %cst = arith.constant dense<0.000000e+00> : vector<16xf32>
    %1 = vector.multi_reduction <add>, %0, %cst [0] : vector<8x16xf32> to vector<16xf32>
    %2 = vector.shape_cast %1 : vector<16xf32> to vector<1x16xf32>
    %cst_1 = arith.constant 8.000000e+00 : f32
    %3 = vector.broadcast %cst_1 : f32 to vector<1x16xf32>
    %4 = arith.divf %2, %3 : vector<1x16xf32>
    %5 = vector.broadcast %4 : vector<1x16xf32> to vector<8x16xf32>
    %6 = arith.subf %0, %5 : vector<8x16xf32>
    %7 = arith.mulf %6, %6 : vector<8x16xf32>
    %cst_2 = arith.constant dense<0.000000e+00> : vector<16xf32>
    %8 = vector.multi_reduction <add>, %7, %cst_2 [0] : vector<8x16xf32> to vector<16xf32>
    %9 = vector.shape_cast %8 : vector<16xf32> to vector<1x16xf32>
    %cst_3 = arith.constant 8.000000e+00 : f32
    %10 = vector.broadcast %cst_3 : f32 to vector<1x16xf32>
    %11 = arith.divf %9, %10 : vector<1x16xf32>
    %c0_4 = arith.constant 0 : index
    %c0_5 = arith.constant 0 : index
    %12 = vector.load %arg1[%c0_4, %c0_5] : memref<1x16xf32, #tpu.memory_space<vmem>>, vector<1x16xf32>
    %cst_6 = arith.constant 9.99999974E-6 : f32
    %13 = vector.broadcast %cst_6 : f32 to vector<1x16xf32>
    %14 = arith.addf %11, %13 : vector<1x16xf32>
    %15 = math.rsqrt %14 : vector<1x16xf32>
    %16 = arith.mulf %12, %15 : vector<1x16xf32>
    %c0_7 = arith.constant 0 : index
    %c0_8 = arith.constant 0 : index
    %17 = vector.load %arg2[%c0_7, %c0_8] : memref<1x16xf32, #tpu.memory_space<vmem>>, vector<1x16xf32>
    %18 = arith.mulf %4, %16 : vector<1x16xf32>
    %19 = arith.subf %17, %18 : vector<1x16xf32>
    %c0_9 = arith.constant 0 : index
    %c0_10 = arith.constant 0 : index
    %20 = vector.load %arg3[%c0_9, %c0_10] : memref<1x16xf32, #tpu.memory_space<vmem>>, vector<1x16xf32>
    tpu.vector_store %arg3[%c0_9, %c0_10], %16 {strides = array<i32>} : memref<1x16xf32, #tpu.memory_space<vmem>>, vector<1x16xf32>,
    %c0_11 = arith.constant 0 : index
    %c0_12 = arith.constant 0 : index
    %21 = vector.load %arg4[%c0_11, %c0_12] : memref<1x16xf32, #tpu.memory_space<vmem>>, vector<1x16xf32>
    tpu.vector_store %arg4[%c0_11, %c0_12], %19 {strides = array<i32>} : memref<1x16xf32, #tpu.memory_space<vmem>>, vector<1x16xf32>,
    return
  }
}

</mosaic_0001>

<llo_original>
// kernel: tpu_custom_call.1
$region0: #{tpu_custom_call.1}
  #allocation0 [shape = 'u32[]', space=smem, size = 0x4, offset = 0x4, fixed_abs, tag = 'smem constant byte address 0x4 - core index']
  #allocation1 [shape = 'u32[144,128]{1,0:T(1,128)}', space=vmem, size = 0x12000, scoped, tag = 'internal scratch']
  %s0 = inlined_call_operand.hbm [shape: f32[8,16], index: 0, kind: input, shape index: {}]
  %s1 = inlined_call_operand.vmem [shape: f32[1,16], index: 1, kind: input, shape index: {}]
  %s2 = inlined_call_operand.vmem [shape: f32[1,16], index: 2, kind: input, shape index: {}]
  %s3 = inlined_call_operand.hbm [shape: f32[1,16], index: 3, kind: output, shape index: {0}]
  %s4 = inlined_call_operand.hbm [shape: f32[1,16], index: 4, kind: output, shape index: {1}]
  %5 = xla_tuple %s3, %s4
  %s6 = sld [smem:[#allocation0]]
  $region34: #{tpu_custom_call.1} parent=0
    _
  %s8 = ssub.s32 1, %s6
  %s9 = scalar_select 0, %s8, %s6
  $region1: #{tpu_custom_call.1} parent=0
    #allocation2 [shape = 'u8[4096]{0}', space=vmem, size = 0x1000, scoped, tag = 'input window, operand 0, single buffered']
    #allocation3 [shape = 's32[1]{0}', space=sflag, size = 0x4, scoped, tag = 'scoped memory for tpu_custom_call.1']
    #allocation4 [shape = 's32[1]{0}', space=sflag, size = 0x4, scoped, tag = 'scoped memory for tpu_custom_call.1']
    #allocation5 [shape = 'u8[512]{0}', space=vmem, size = 0x400, scoped, tag = 'output window, operand 0, single buffered']
    #allocation6 [shape = 'u8[512]{0}', space=vmem, size = 0x400, scoped, tag = 'output window, operand 1, single buffered']
    #allocation7 [shape = 's32[1]{0}', space=sflag, size = 0x4, scoped, tag = 'scoped memory for tpu_custom_call.1']
    %10 = vsyncpa [#allocation3], 0
    %11 = vsyncpa [#allocation4], 0
    %12 = vsyncpa [#allocation7], 0
    // Predicated region
    $region2: #{tpu_custom_call.1} parent=1 // pred_check
      _
    $region3: #{tpu_custom_call.1} parent=1 // pred_check_branch
      %14 = sbr.rel (0) target = $region5
    $region4: #{tpu_custom_call.1} parent=1 // pred_region
      %s16 = ssub.s32 128, 128
      %17 = vsyncadd [#allocation3], %s16
      %s19 = sshll.u32 [#allocation2], 4
      %s20 = int_to_ptr.vmem [resolvable:$true] %s19
      %22 = dma.hbm_to_vmem [thread:$0]  %s0, 128, %s20, [#allocation3]
    $region5: #{tpu_custom_call.1} parent=1 // pred_fallthru
      _
    // Predicated region
    $region6: #{tpu_custom_call.1} parent=1 // pred_check
      _
    $region7: #{tpu_custom_call.1} parent=1 // pred_check_branch
      %24 = sbr.rel (0) target = $region9
    $region8: #{tpu_custom_call.1} parent=1 // pred_region
      _
    $region9: #{tpu_custom_call.1} parent=1 // pred_fallthru
      _
    // Predicated region
    $region10: #{tpu_custom_call.1} parent=1 // pred_check
      _
    $region11: #{tpu_custom_call.1} parent=1 // pred_check_branch
      %26 = sbr.rel (0) target = $region13
    $region12: #{tpu_custom_call.1} parent=1 // pred_region
      _
    $region13: #{tpu_custom_call.1} parent=1 // pred_fallthru
      _
    // Predicated region
    $region14: #{tpu_custom_call.1} parent=1 // pred_check
      _
    $region15: #{tpu_custom_call.1} parent=1 // pred_check_branch
      %28 = sbr.rel (0) target = $region17
    $region16: #{tpu_custom_call.1} parent=1 // pred_region
      %29 = dma.done [#allocation3], 128
    $region17: #{tpu_custom_call.1} parent=1 // pred_fallthru
      _
    %v30 = vld [vmem:[#allocation2] sm:$0xff]
    %vm31 = vcmask 130048
    %v32 = vsel %vm31, %v30, 0.0
    %v33 = vrot.slane %v32, 4
    %v34 = vadd.f32 %v32, %v33
    %v35 = vrot.slane %v34, 2
    %v36 = vadd.f32 %v34, %v35
    %v37 = vrot.slane %v36, 1
    %v38 = vadd.f32 %v36, %v37
    %v39 = vrcp.pop 8.0
    %v40 = vmul.f32 %v38, %v39
    %v41 = vsub.f32 %v30, %v40
    %v42 = vmul.f32 %v41, %v41
    %v43 = vsel %vm31, %v42, 0.0
    %v44 = vrot.slane %v43, 4
    %v45 = vadd.f32 %v43, %v44
    %v46 = vrot.slane %v45, 2
    %v47 = vadd.f32 %v45, %v46
    %v48 = vrot.slane %v47, 1
    %v49 = vadd.f32 %v47, %v48
    %v50 = vmul.f32 %v49, %v39
    %v51 = vld [vmem:[%s1] sm:$0x1]
    %v52 = vadd.f32 %v50, 1e-05
    %v53 = vrsqrt.pop %v52
    %v54 = vmul.f32 %v51, %v53
    %v55 = vld [vmem:[%s2] sm:$0x1]
    %v56 = vmul.f32 %v40, %v54
    %v57 = vsub.f32 %v55, %v56
    %vm58 = vcmask 122880
    %59 = vst.msk [vmem:[#allocation5] sm:$0x1] %vm58, %v54
    %60 = vst.msk [vmem:[#allocation6] sm:$0x1] %vm58, %v57
    // Predicated region
    $region18: #{tpu_custom_call.1} parent=1 // pred_check
      _
    $region19: #{tpu_custom_call.1} parent=1 // pred_check_branch
      %62 = sbr.rel (0) target = $region21
    $region20: #{tpu_custom_call.1} parent=1 // pred_region
      %s64 = ssub.s32 16, 16
      %65 = vsyncadd [#allocation4], %s64
      %s67 = sshll.u32 [#allocation5], 4
      %s68 = int_to_ptr.vmem [resolvable:$true] %s67
      %70 = dma.vmem_to_hbm [thread:$0]  %s68, 16, %s3, [#allocation4]
    $region21: #{tpu_custom_call.1} parent=1 // pred_fallthru
      _
    // Predicated region
    $region22: #{tpu_custom_call.1} parent=1 // pred_check
      _
    $region23: #{tpu_custom_call.1} parent=1 // pred_check_branch
      %72 = sbr.rel (0) target = $region25
    $region24: #{tpu_custom_call.1} parent=1 // pred_region
      %s74 = ssub.s32 16, 16
      %75 = vsyncadd [#allocation7], %s74
      %s77 = sshll.u32 [#allocation6], 4
      %s78 = int_to_ptr.vmem [resolvable:$true] %s77
      %80 = dma.vmem_to_hbm [thread:$0]  %s78, 16, %s4, [#allocation7]
    $region25: #{tpu_custom_call.1} parent=1 // pred_fallthru
      _
    // Predicated region
    $region26: #{tpu_custom_call.1} parent=1 // pred_check
      _
    $region27: #{tpu_custom_call.1} parent=1 // pred_check_branch
      %82 = sbr.rel (0) target = $region29
    $region28: #{tpu_custom_call.1} parent=1 // pred_region
      %83 = dma.done [#allocation4], 16
    $region29: #{tpu_custom_call.1} parent=1 // pred_fallthru
      _
    // Predicated region
    $region30: #{tpu_custom_call.1} parent=1 // pred_check
      _
    $region31: #{tpu_custom_call.1} parent=1 // pred_check_branch
      %85 = sbr.rel (0) target = $region33
    $region32: #{tpu_custom_call.1} parent=1 // pred_region
      %86 = dma.done [#allocation7], 16
    $region33: #{tpu_custom_call.1} parent=1 // pred_fallthru
      _
    %87 = vsyncpa [#allocation3], 1
    %88 = vsyncpa [#allocation4], 1
    %89 = vsyncpa [#allocation7], 1

</llo_original>
